<compile_context>
chip_gen: v6e
topology: v6e:2x2x1
jax: 0.10.0
libtpu: 0.0.40
codegen_flags: <defaults>
</compile_context>

<pallas_src>
import math

import jax
import jax.numpy as jnp
from jax.experimental import pallas as pl
from jax.experimental.pallas import tpu as pltpu


# ----------------------------------------------------------------------------
# "Parameter" setup: deterministic sin/cos table, shape (1, max_len, d_embed).
# ----------------------------------------------------------------------------
def build_encoding(d_embed: int, max_len: int = 256) -> jnp.ndarray:
    position = jnp.arange(0, max_len, dtype=jnp.float32)[:, None]           # (max_len, 1)
    div_term = jnp.exp(
        jnp.arange(0, d_embed, 2, dtype=jnp.float32) * -(math.log(10000.0) / d_embed)
    )                                                                        # (ceil(d/2),)
    angles = position * div_term                                             # (max_len, ceil(d/2))
    enc = jnp.zeros((max_len, d_embed), dtype=jnp.float32)
    enc = enc.at[:, 0::2].set(jnp.sin(angles))
    enc = enc.at[:, 1::2].set(jnp.cos(angles)[:, : d_embed // 2])            # safe for odd d_embed
    return enc[None, :, :]                                                   # (1, max_len, d_embed)


# ----------------------------------------------------------------------------
# Static (trace-time) joint block-size heuristics.
# ----------------------------------------------------------------------------
_BLOCK_TARGET_BYTES = 4 * 1024 * 1024   # ~4 MiB per x/out block (review sweet spot)
_VMEM_LIMIT_BYTES = 32 * 1024 * 1024    # raise v5e's 16 MiB default; == v6e/v7x default


def _round_up(n: int, m: int) -> int:
    return ((n + m - 1) // m) * m


def _best_tile(dim: int, quantum: int, cap: int):
    """Largest divisor of `dim` that is a multiple of `quantum` and <= cap (or None)."""
    best = None
    d = 1
    while d * d <= dim:
        if dim % d == 0:
            for cand in (d, dim // d):
                if cand % quantum == 0 and cand <= cap and (best is None or cand > best):
                    best = cand
        d += 1
    return best


def _choose_blocks(B: int, S: int, D: int, itemsize: int):
    """Pick (bb, br, bc) jointly so bb*br*bc (VMEM-padded) ~ _BLOCK_TARGET_BYTES."""
    target = _BLOCK_TARGET_BYTES
    # Lane tile: multiple of 128 dividing D, or the full dim (always legal).
    if D % 128 == 0:
        bc = _best_tile(D, 128, max(128, target // (8 * itemsize)))
    else:
        bc = D
    pad_bc = _round_up(bc, 128)          # VMEM pads lanes to 128
    # Sublane tile from the sequence axis: multiple-of-8 divisor of S, or full S.
    br = _best_tile(S, 8, max(8, target // (pad_bc * itemsize))) or S
    pad_br = _round_up(br, 8)            # VMEM pads sublanes to 8
    # Batch tile: largest divisor of B that keeps the block near the byte target.
    bb = _best_tile(B, 1, max(1, target // (pad_br * pad_bc * itemsize)))
    return bb, br, bc


# ----------------------------------------------------------------------------
# Kernel: out = x + pe (pe broadcast over the batch sub-block).
# ----------------------------------------------------------------------------
def _pe_add_kernel(x_ref, pe_ref, o_ref):
    # x_ref/o_ref: (bb, br, bc); pe_ref: (1, br, bc) -> broadcast over batch.
    o_ref[...] = x_ref[...] + pe_ref[...]


@jax.jit
def _pe_forward(x: jnp.ndarray, pe: jnp.ndarray) -> jnp.ndarray:
    """x: (B, S, D); pe: (1, S, D) already in x.dtype. Returns x + pe."""
    B, S, D = x.shape
    itemsize = jnp.dtype(x.dtype).itemsize
    bb, br, bc = _choose_blocks(B, S, D, itemsize)
    grid = (S // br, D // bc, B // bb)   # batch innermost -> PE block index constant

    return pl.pallas_call(
        _pe_add_kernel,
        out_shape=jax.ShapeDtypeStruct((B, S, D), x.dtype),
        grid_spec=pltpu.PrefetchScalarGridSpec(
            num_scalar_prefetch=0,
            grid=grid,
            in_specs=[
                # x: streamed/pipelined (bb, br, bc) blocks.
                pl.BlockSpec((bb, br, bc), lambda s, c, b: (b, s, c)),
                # PE: streamed (1, br, bc) blocks; index ignores the innermost
                # batch axis, so each block is DMA'd exactly once and reused.
                pl.BlockSpec((1, br, bc), lambda s, c, b: (0, s, c)),
            ],
            out_specs=pl.BlockSpec((bb, br, bc), lambda s, c, b: (b, s, c)),
        ),
        compiler_params=pltpu.CompilerParams(
            dimension_semantics=("parallel", "parallel", "parallel"),
            vmem_limit_bytes=_VMEM_LIMIT_BYTES,
        ),
        # Elementwise add: out may reuse x's HBM buffer (x is a plain
        # contiguous (B, S, D) array; no reshape, so never forces a copy
        # for layout reasons).
        input_output_aliases={0: 0},
    )(x, pe)


# ----------------------------------------------------------------------------
# Module-style wrapper mirroring the PyTorch class.
# ----------------------------------------------------------------------------
class PositionalEncoding:
    def __init__(self, d_embed: int, max_len: int = 256):
        self.encoding = build_encoding(d_embed, max_len)   # (1, max_len, d_embed) f32
        self.max_len = max_len
        self._pe_cache = {}  # (seq_len, dtype) -> sliced/cast table, hoisted out of forward

    def __call__(self, x: jnp.ndarray) -> jnp.ndarray:
        B, S, D = x.shape
        assert S <= self.max_len, "seq_len exceeds max_len"
        key = (S, str(x.dtype))
        pe = self._pe_cache.get(key)
        if pe is None:
            # Cast once per (seq_len, dtype); bf16 inputs add in bf16 (tiny
            # deviation vs PyTorch's f32 promotion, values are in [-1, 1]).
            pe = self.encoding[:, :S, :].astype(x.dtype)
            self._pe_cache[key] = pe
        return _pe_forward(x, pe)


if __name__ == "__main__":
    # Small shapes consistent with the module: batch=2, seq=8, d_embed=32.
    B, S, D = 2, 8, 32
    MAX_LEN = 256

    key = jax.random.PRNGKey(0)
    x = jax.random.normal(key, (B, S, D), dtype=jnp.float32)

    module = PositionalEncoding(d_embed=D, max_len=MAX_LEN)
    out = jax.block_until_ready(module(x))

    # Reference check in plain JAX (same math as the PyTorch forward).
    ref = x + module.encoding[:, :S, :]
    assert out.shape == (B, S, D)
    assert jnp.allclose(out, ref, atol=1e-6), "mismatch vs reference"

    print("KERNEL_OK")
</pallas_src>

<mosaic_0001>
module attributes {stable_mosaic.version = 11 : i64} {
  func.func @_pe_add_kernel(%arg0: i32, %arg1: i32, %arg2: i32, %arg3: memref<2x8x32xf32, #tpu.memory_space<vmem>>, %arg4: memref<1x8x32xf32, #tpu.memory_space<vmem>>, %arg5: memref<2x8x32xf32, #tpu.memory_space<vmem>>) attributes {dimension_semantics = [#tpu.dimension_semantics<parallel>, #tpu.dimension_semantics<parallel>, #tpu.dimension_semantics<parallel>], iteration_bounds = array<i64: 1, 1, 1>, scalar_prefetch = 0 : i64, scratch_operands = 0 : i64, tpu.core_type = #tpu.core_type<tc>, window_params = [{transform_indices = @transform_0, window_bounds = array<i64: 2, 8, 32>}, {transform_indices = @transform_1, window_bounds = array<i64: 1, 8, 32>}, {transform_indices = @transform_2, window_bounds = array<i64: 2, 8, 32>}]} {
    %c0 = arith.constant 0 : index
    %c0_0 = arith.constant 0 : index
    %c0_1 = arith.constant 0 : index
    %0 = vector.load %arg3[%c0, %c0_0, %c0_1] : memref<2x8x32xf32, #tpu.memory_space<vmem>>, vector<2x8x32xf32>
    %c0_2 = arith.constant 0 : index
    %c0_3 = arith.constant 0 : index
    %c0_4 = arith.constant 0 : index
    %1 = vector.load %arg4[%c0_2, %c0_3, %c0_4] : memref<1x8x32xf32, #tpu.memory_space<vmem>>, vector<1x8x32xf32>
    %2 = vector.broadcast %1 : vector<1x8x32xf32> to vector<2x8x32xf32>
    %3 = arith.addf %0, %2 : vector<2x8x32xf32>
    %c0_5 = arith.constant 0 : index
    %c0_6 = arith.constant 0 : index
    %c0_7 = arith.constant 0 : index
    %4 = vector.load %arg5[%c0_5, %c0_6, %c0_7] : memref<2x8x32xf32, #tpu.memory_space<vmem>>, vector<2x8x32xf32>
    tpu.vector_store %arg5[%c0_5, %c0_6, %c0_7], %3 {strides = array<i32>} : memref<2x8x32xf32, #tpu.memory_space<vmem>>, vector<2x8x32xf32>,
    return
  }
  func.func @transform_0(%arg0: i32, %arg1: i32, %arg2: i32) -> (i32, i32, i32) {
    %c0_i32 = arith.constant 0 : i32
    return %arg2, %arg0, %arg1 : i32, i32, i32
  }
  func.func @transform_1(%arg0: i32, %arg1: i32, %arg2: i32) -> (i32, i32, i32) {
    %c0_i32 = arith.constant 0 : i32
    %c0_i32_0 = arith.constant 0 : i32
    return %c0_i32, %arg0, %arg1 : i32, i32, i32
  }
  func.func @transform_2(%arg0: i32, %arg1: i32, %arg2: i32) -> (i32, i32, i32) {
    %c0_i32 = arith.constant 0 : i32
    return %arg2, %arg0, %arg1 : i32, i32, i32
  }
}

</mosaic_0001>

<llo_original>
// kernel: _pe_forward.1
$region0: #{_pe_forward.1}
  #allocation0 [shape = 'u32[]', space=smem, size = 0x4, offset = 0x4, fixed_abs, tag = 'smem constant byte address 0x4 - core index']
  #allocation1 [shape = 'u32[144,128]{1,0:T(1,128)}', space=vmem, size = 0x12000, scoped, tag = 'internal scratch']
  %s0 = inlined_call_operand.hbm [shape: f32[2,8,32], index: 0, kind: input, shape index: {}, may-alias: {0,2}]
  %s1 = inlined_call_operand.vmem [shape: f32[1,8,32], index: 1, kind: input, shape index: {}]
  %s2 = inlined_call_operand.hbm [shape: f32[2,8,32], index: 2, kind: output, shape index: {}, may-alias: {0,2}]
  %s3 = sld [smem:[#allocation0]]
  $region22: #{_pe_forward.1} parent=0
    _
  %s5 = ssub.s32 1, %s3
  %s6 = scalar_select 0, %s5, %s3
  $region1: #{_pe_forward.1} parent=0
    #allocation2 [shape = 'u8[8192]{0}', space=vmem, size = 0x2000, scoped, tag = 'input window, operand 0, single buffered']
    #allocation3 [shape = 's32[1]{0}', space=sflag, size = 0x4, scoped, tag = 'scoped memory for _pe_forward.1']
    #allocation4 [shape = 's32[1]{0}', space=sflag, size = 0x4, scoped, tag = 'scoped memory for _pe_forward.1']
    #allocation5 [shape = 'u8[8192]{0}', space=vmem, size = 0x2000, scoped, tag = 'output window, operand 0, single buffered']
    %7 = vsyncpa [#allocation3], 0
    %8 = vsyncpa [#allocation4], 0
    // Predicated region
    $region2: #{_pe_forward.1} parent=1 // pred_check
      _
    $region3: #{_pe_forward.1} parent=1 // pred_check_branch
      %10 = sbr.rel (0) target = $region5
    $region4: #{_pe_forward.1} parent=1 // pred_region
      %s12 = ssub.s32 256, 256
      %13 = vsyncadd [#allocation3], %s12
      %s14 = sshll.u32 [#allocation2], 4
      %s15 = int_to_ptr.vmem [resolvable:$true] %s14
      %20 = dma.hbm_to_vmem [thread:$0]  %s0, 256, %s15, [#allocation3], 128, 128, 8
    $region5: #{_pe_forward.1} parent=1 // pred_fallthru
      _
    // Predicated region
    $region6: #{_pe_forward.1} parent=1 // pred_check
      _
    $region7: #{_pe_forward.1} parent=1 // pred_check_branch
      %22 = sbr.rel (0) target = $region9
    $region8: #{_pe_forward.1} parent=1 // pred_region
      _
    $region9: #{_pe_forward.1} parent=1 // pred_fallthru
      _
    // Predicated region
    $region10: #{_pe_forward.1} parent=1 // pred_check
      _
    $region11: #{_pe_forward.1} parent=1 // pred_check_branch
      %24 = sbr.rel (0) target = $region13
    $region12: #{_pe_forward.1} parent=1 // pred_region
      %25 = dma.done [#allocation3], 256
    $region13: #{_pe_forward.1} parent=1 // pred_fallthru
      _
    %v26 = vld [vmem:[#allocation2] sm:$0xff]
    %v27 = vld [vmem:[#allocation2 + $0x8] sm:$0xff]
    %v28 = vld [vmem:[%s1] sm:$0xff]
    %v29 = vadd.f32 %v26, %v28
    %v30 = vadd.f32 %v27, %v28
    %vm31 = vcmask 261120
    %32 = vst.msk [vmem:[#allocation5] sm:$0xff] %vm31, %v29
    %33 = vst.msk [vmem:[#allocation5 + $0x8] sm:$0xff] %vm31, %v30
    // Predicated region
    $region14: #{_pe_forward.1} parent=1 // pred_check
      _
    $region15: #{_pe_forward.1} parent=1 // pred_check_branch
      %35 = sbr.rel (0) target = $region17
    $region16: #{_pe_forward.1} parent=1 // pred_region
      %s37 = ssub.s32 256, 256
      %38 = vsyncadd [#allocation4], %s37
      %s39 = sshll.u32 [#allocation5], 4
      %s40 = int_to_ptr.vmem [resolvable:$true] %s39
      %45 = dma.vmem_to_hbm [thread:$0]  %s40, 256, %s2, [#allocation4], 128, 128, 8
    $region17: #{_pe_forward.1} parent=1 // pred_fallthru
      _
    // Predicated region
    $region18: #{_pe_forward.1} parent=1 // pred_check
      _
    $region19: #{_pe_forward.1} parent=1 // pred_check_branch
      %47 = sbr.rel (0) target = $region21
    $region20: #{_pe_forward.1} parent=1 // pred_region
      %48 = dma.done [#allocation4], 256
    $region21: #{_pe_forward.1} parent=1 // pred_fallthru
      _
    %49 = vsyncpa [#allocation3], 1
    %50 = vsyncpa [#allocation4], 1

</llo_original>
